<compile_context>
chip_gen: v6e
topology: v6e:2x2x1
jax: 0.10.0
libtpu: 0.0.40
codegen_flags: <defaults>
</compile_context>

<pallas_src>
import functools

import jax
import jax.numpy as jnp
from jax.experimental import pallas as pl
from jax.experimental.pallas import tpu as pltpu


def _dual_fusion_kernel(
    x_ref, cnf_ref, w_big_ref, w_feat_ref, bias_ref,
    x_out_ref, cnf_out_ref,
    *, kernel_size, dilation, pad, shift):
  """One grid step == one batch block. All refs live in VMEM.

  x_ref, cnf_ref : (B_blk, L, C)    bf16
  w_big_ref      : (2*K*C, 2*C)     bf16  rows = [x taps k=0..K-1, cnf taps ...]
                                          cols = [pos (0:C) | conf (C:2C)],
                                          BN scales already folded into columns.
  w_feat_ref     : (C, C)           bf16  1x1 feat conv, feat BN scale folded in.
  bias_ref       : (3, C)           f32   [pos_bias, conf_bias, feat_bias]
  """
  C = x_ref.shape[2]
  L_out = x_out_ref.shape[1]

  # im2col directly from the bf16 refs: single (B, L_out, 2*K*C) LHS -> one
  # MXU contraction covering both branches (pos + conf) and all taps.
  taps = [x_ref[:, pl.ds(k * dilation, L_out), :] for k in range(kernel_size)]
  taps += [cnf_ref[:, pl.ds(k * dilation, L_out), :] for k in range(kernel_size)]
  lhs = jnp.concatenate(taps, axis=-1)                       # (B, L_out, 2KC) bf16

  acc = jax.lax.dot_general(
      lhs, w_big_ref[...],
      dimension_numbers=(((2,), (0,)), ((), ())),
      preferred_element_type=jnp.float32)                    # (B, L_out, 2C) f32
  acc_pos = acc[..., :C]
  acc_conf = acc[..., C:]

  b_pos = jnp.reshape(bias_ref[0:1, :], (1, 1, C))
  b_conf = jnp.reshape(bias_ref[1:2, :], (1, 1, C))
  b_feat = jnp.reshape(bias_ref[2:3, :], (1, 1, C))

  # FeatFusionConv: sigmoid(BN(conv_x(x) + conv_cnf(cnf)))  (BN scale folded).
  pos = jax.nn.sigmoid(acc_pos + b_pos)
  cnf_o = jax.nn.sigmoid(acc_conf + b_conf)

  # feat_conv: 1x1 Conv1d -> BN -> ReLU  (BN scale folded into w_feat).
  feat = jax.lax.dot_general(
      pos.astype(jnp.bfloat16), w_feat_ref[...],
      dimension_numbers=(((2,), (0,)), ((), ())),
      preferred_element_type=jnp.float32)                    # (B, L_out, C) f32
  feat = jnp.maximum(feat + b_feat, 0.0)

  # residual: x[:, pad+shift : L - pad + shift, :]  (length == L_out)
  res = x_ref[:, pl.ds(pad + shift, L_out), :].astype(jnp.float32)

  x_out_ref[...] = (res + feat).astype(x_out_ref.dtype)
  cnf_out_ref[...] = cnf_o.astype(cnf_out_ref.dtype)


def _vmem_limit_bytes():
  """Generation-aware scoped-VMEM limit with a safe fallback."""
  try:
    cap = int(pltpu.get_tpu_info().vmem_capacity_bytes)
    # 3/4 of physical: ~96 MiB on 128 MiB chips (v5e/v6e), ~48 MiB on v7x.
    return int(min(96 * 2**20, max(32 * 2**20, (3 * cap) // 4)))
  except Exception:
    return 32 * 2**20


def conf_conv_block_input_dual_fusion_nlc(x_nlc, cnf_nlc, params, *, pad, shift,
                                          kernel_size, dilation,
                                          batch_block=None):
  """Optimized entry point: NLC layout, bf16 activations in / bf16 out."""
  N, L, C = x_nlc.shape
  assert x_nlc.shape == cnf_nlc.shape
  K = kernel_size
  L_out = L - dilation * (K - 1)
  assert L - 2 * pad == L_out, "residual slice must match conv output length"
  assert 0 <= pad + shift and L - pad + shift <= L

  def fold_bn(bn, eps=1e-5):
    scale = bn["gamma"] / jnp.sqrt(bn["var"] + eps)
    bias = bn["beta"] - bn["mean"] * scale
    return scale.astype(jnp.float32), bias.astype(jnp.float32)

  pos_s, pos_b = fold_bn(params["bn_pos"])
  conf_s, conf_b = fold_bn(params["bn_conf"])
  feat_s, feat_b = fold_bn(params["bn_feat"])

  def tap(w_oik, k):  # PyTorch (C_out, C_in, K) tap k -> (C_in, C_out)
    return jnp.transpose(w_oik[:, :, k], (1, 0))

  # Pack the 4 dilated-conv weights into one (2*K*C, 2*C) matrix with the
  # pos/conf BN scales folded into the corresponding output columns.
  rows = []
  for k in range(K):
    rows.append(jnp.concatenate(
        [tap(params["w_pos_x"], k) * pos_s[None, :],
         tap(params["w_conf_x"], k) * conf_s[None, :]], axis=1))
  for k in range(K):
    rows.append(jnp.concatenate(
        [tap(params["w_pos_c"], k) * pos_s[None, :],
         tap(params["w_conf_c"], k) * conf_s[None, :]], axis=1))
  w_big = jnp.concatenate(rows, axis=0).astype(jnp.bfloat16)        # (2KC, 2C)

  w_feat = (jnp.transpose(params["w_feat"][:, :, 0], (1, 0))
            * feat_s[None, :]).astype(jnp.bfloat16)                 # (C, C)

  bias_pack = jnp.stack([pos_b, conf_b, feat_b], axis=0)            # (3, C) f32

  # Batch blocking: target >=256 MXU rows per step, clamp to N, pad batch.
  if batch_block is None:
    batch_block = max(1, min(N, -(-256 // max(L_out, 1))))
  n_blocks = -(-N // batch_block)
  n_pad = n_blocks * batch_block
  if n_pad != N:
    padw = ((0, n_pad - N), (0, 0), (0, 0))
    x_nlc = jnp.pad(x_nlc, padw)
    cnf_nlc = jnp.pad(cnf_nlc, padw)

  kern = functools.partial(_dual_fusion_kernel, kernel_size=K,
                           dilation=dilation, pad=pad, shift=shift)

  in_specs = [
      pl.BlockSpec((batch_block, L, C), lambda n: (n, 0, 0)),       # x (bf16)
      pl.BlockSpec((batch_block, L, C), lambda n: (n, 0, 0)),       # cnf (bf16)
      pl.BlockSpec((2 * K * C, 2 * C), lambda n: (0, 0)),           # packed conv W
      pl.BlockSpec((C, C), lambda n: (0, 0)),                       # 1x1 feat W
      pl.BlockSpec((3, C), lambda n: (0, 0)),                       # packed BN biases
  ]
  out_specs = (pl.BlockSpec((batch_block, L_out, C), lambda n: (n, 0, 0)),
               pl.BlockSpec((batch_block, L_out, C), lambda n: (n, 0, 0)))
  out_shapes = (jax.ShapeDtypeStruct((n_pad, L_out, C), jnp.bfloat16),
                jax.ShapeDtypeStruct((n_pad, L_out, C), jnp.bfloat16))

  x_out, cnf_out = pl.pallas_call(
      kern,
      grid=(n_blocks,),
      in_specs=in_specs,
      out_specs=out_specs,
      out_shape=out_shapes,
      compiler_params=pltpu.CompilerParams(
          dimension_semantics=("parallel",),       # batch blocks are independent
          vmem_limit_bytes=_vmem_limit_bytes()),
  )(x_nlc.astype(jnp.bfloat16), cnf_nlc.astype(jnp.bfloat16),
    w_big, w_feat, bias_pack)

  if n_pad != N:
    x_out = x_out[:N]
    cnf_out = cnf_out[:N]
  return x_out, cnf_out


def conf_conv_block_input_dual_fusion(x_ncl, cnf_ncl, params, *, pad, shift,
                                      kernel_size, dilation, batch_block=None):
  """PyTorch-convention (N, C, L) compatibility wrapper. Prefer the NLC entry
  point above when the producer/consumer can supply NLC directly (the NCL<->NLC
  transposes here cost full HBM passes on their own)."""
  x_nlc = jnp.transpose(x_ncl, (0, 2, 1))
  cnf_nlc = jnp.transpose(cnf_ncl, (0, 2, 1))
  x_o, c_o = conf_conv_block_input_dual_fusion_nlc(
      x_nlc, cnf_nlc, params, pad=pad, shift=shift,
      kernel_size=kernel_size, dilation=dilation, batch_block=batch_block)
  return jnp.transpose(x_o, (0, 2, 1)), jnp.transpose(c_o, (0, 2, 1))


# ----------------------- pure-JAX reference (for checking) ------------------

def _conv1d_ncl(x, w_oik, dilation):
  return jax.lax.conv_general_dilated(
      x, w_oik, window_strides=(1,), padding="VALID",
      rhs_dilation=(dilation,), dimension_numbers=("NCH", "OIH", "NCH"),
      precision=jax.lax.Precision.HIGHEST)


def _bn_eval_ncl(y, bn, eps=1e-5):
  scale = bn["gamma"] / jnp.sqrt(bn["var"] + eps)
  bias = bn["beta"] - bn["mean"] * scale
  return y * scale[None, :, None] + bias[None, :, None]


def reference_forward(x, cnf, params, *, pad, shift, dilation):
  L = x.shape[2]
  res = x[:, :, pad + shift:L - pad + shift]
  cnf_o = jax.nn.sigmoid(_bn_eval_ncl(
      _conv1d_ncl(x, params["w_conf_x"], dilation)
      + _conv1d_ncl(cnf, params["w_conf_c"], dilation), params["bn_conf"]))
  xp = jax.nn.sigmoid(_bn_eval_ncl(
      _conv1d_ncl(x, params["w_pos_x"], dilation)
      + _conv1d_ncl(cnf, params["w_pos_c"], dilation), params["bn_pos"]))
  feat = jax.nn.relu(_bn_eval_ncl(_conv1d_ncl(xp, params["w_feat"], 1),
                                  params["bn_feat"]))
  return res + feat, cnf_o


# --------------------------------- main --------------------------------------

if __name__ == "__main__":
  N, C, L = 2, 8, 16
  K, dilation, pad, shift = 3, 1, 1, 1   # dropout has no effect in eval mode

  key = jax.random.PRNGKey(0)
  ks = jax.random.split(key, 10)

  def conv_w(k, ksize):
    return 0.3 * jax.random.normal(k, (C, C, ksize), dtype=jnp.float32)

  def bn_params(k):
    k1, k2, k3, k4 = jax.random.split(k, 4)
    return {"gamma": 1.0 + 0.1 * jax.random.normal(k1, (C,), jnp.float32),
            "beta": 0.1 * jax.random.normal(k2, (C,), jnp.float32),
            "mean": 0.1 * jax.random.normal(k3, (C,), jnp.float32),
            "var": jax.random.uniform(k4, (C,), jnp.float32, 0.5, 1.5)}

  # Quantize conv weights through bf16 so the f32 reference sees the same
  # values the bf16 kernel weights carry (BN params stay f32).
  def q(a):
    return a.astype(jnp.bfloat16).astype(jnp.float32)

  params = {
      "w_pos_x": q(conv_w(ks[0], K)), "w_pos_c": q(conv_w(ks[1], K)),
      "w_conf_x": q(conv_w(ks[2], K)), "w_conf_c": q(conv_w(ks[3], K)),
      "w_feat": q(conv_w(ks[4], 1)),
      "bn_pos": bn_params(ks[5]), "bn_conf": bn_params(ks[6]),
      "bn_feat": bn_params(ks[7]),
  }

  # Activations generated directly in the kernel-native NLC/bf16 layout — the
  # hot path has no wrapper transpose or dtype cast.
  x_nlc = jax.random.normal(ks[8], (N, L, C), jnp.float32).astype(jnp.bfloat16)
  cnf_nlc = jax.random.normal(ks[9], (N, L, C), jnp.float32).astype(jnp.bfloat16)

  x_out_nlc, cnf_out_nlc = conf_conv_block_input_dual_fusion_nlc(
      x_nlc, cnf_nlc, params, pad=pad, shift=shift,
      kernel_size=K, dilation=dilation)
  jax.block_until_ready((x_out_nlc, cnf_out_nlc))

  # Reference in PyTorch NCL / f32 precision.
  x_ncl = jnp.transpose(x_nlc.astype(jnp.float32), (0, 2, 1))
  cnf_ncl = jnp.transpose(cnf_nlc.astype(jnp.float32), (0, 2, 1))
  x_ref_ncl, cnf_ref_ncl = reference_forward(
      x_ncl, cnf_ncl, params, pad=pad, shift=shift, dilation=dilation)
  x_ref = jnp.transpose(x_ref_ncl, (0, 2, 1))
  cnf_ref = jnp.transpose(cnf_ref_ncl, (0, 2, 1))

  assert x_out_nlc.shape == x_ref.shape and cnf_out_nlc.shape == cnf_ref.shape
  # bf16 MXU path + BN-scale folding into bf16 weights + bf16 output rounding
  # vs an f32 HIGHEST-precision reference -> a few 1e-3; 3e-2 is comfortable.
  assert jnp.allclose(x_out_nlc.astype(jnp.float32), x_ref, atol=3e-2, rtol=3e-2)
  assert jnp.allclose(cnf_out_nlc.astype(jnp.float32), cnf_ref, atol=3e-2, rtol=3e-2)
  print("KERNEL_OK")
</pallas_src>

<mosaic_0001>
module attributes {stable_mosaic.version = 11 : i64} {
  func.func @_dual_fusion_kernel(%arg0: i32, %arg1: memref<2x16x8xbf16, #tpu.memory_space<vmem>>, %arg2: memref<2x16x8xbf16, #tpu.memory_space<vmem>>, %arg3: memref<48x16xbf16, #tpu.memory_space<vmem>>, %arg4: memref<8x8xbf16, #tpu.memory_space<vmem>>, %arg5: memref<3x8xf32, #tpu.memory_space<vmem>>, %arg6: memref<2x14x8xbf16, #tpu.memory_space<vmem>>, %arg7: memref<2x14x8xbf16, #tpu.memory_space<vmem>>) attributes {dimension_semantics = [#tpu.dimension_semantics<parallel>], iteration_bounds = array<i64: 1>, scalar_prefetch = 0 : i64, scratch_operands = 0 : i64, tpu.core_type = #tpu.core_type<tc>, window_params = [{transform_indices = @transform_0, window_bounds = array<i64: 2, 16, 8>}, {transform_indices = @transform_1, window_bounds = array<i64: 2, 16, 8>}, {pipeline_mode = #tpu.pipeline_mode<synchronous>, transform_indices = @transform_2, window_bounds = array<i64: 48, 16>}, {pipeline_mode = #tpu.pipeline_mode<synchronous>, transform_indices = @transform_3, window_bounds = array<i64: 8, 8>}, {pipeline_mode = #tpu.pipeline_mode<synchronous>, transform_indices = @transform_4, window_bounds = array<i64: 3, 8>}, {transform_indices = @transform_5, window_bounds = array<i64: 2, 14, 8>}, {transform_indices = @transform_6, window_bounds = array<i64: 2, 14, 8>}]} {
    %c0 = arith.constant 0 : index
    %c0_0 = arith.constant 0 : index
    %c0_1 = arith.constant 0 : index
    %0 = vector.load %arg1[%c0, %c0_0, %c0_1] : memref<2x16x8xbf16, #tpu.memory_space<vmem>>, vector<2x14x8xbf16>
    %c0_2 = arith.constant 0 : index
    %c1 = arith.constant 1 : index
    %c0_3 = arith.constant 0 : index
    %1 = vector.load %arg1[%c0_2, %c1, %c0_3] : memref<2x16x8xbf16, #tpu.memory_space<vmem>>, vector<2x14x8xbf16>
    %c0_4 = arith.constant 0 : index
    %c2 = arith.constant 2 : index
    %c0_5 = arith.constant 0 : index
    %2 = vector.load %arg1[%c0_4, %c2, %c0_5] : memref<2x16x8xbf16, #tpu.memory_space<vmem>>, vector<2x14x8xbf16>
    %c0_6 = arith.constant 0 : index
    %c0_7 = arith.constant 0 : index
    %c0_8 = arith.constant 0 : index
    %3 = vector.load %arg2[%c0_6, %c0_7, %c0_8] : memref<2x16x8xbf16, #tpu.memory_space<vmem>>, vector<2x14x8xbf16>
    %c0_9 = arith.constant 0 : index
    %c1_10 = arith.constant 1 : index
    %c0_11 = arith.constant 0 : index
    %4 = vector.load %arg2[%c0_9, %c1_10, %c0_11] : memref<2x16x8xbf16, #tpu.memory_space<vmem>>, vector<2x14x8xbf16>
    %c0_12 = arith.constant 0 : index
    %c2_13 = arith.constant 2 : index
    %c0_14 = arith.constant 0 : index
    %5 = vector.load %arg2[%c0_12, %c2_13, %c0_14] : memref<2x16x8xbf16, #tpu.memory_space<vmem>>, vector<2x14x8xbf16>
    %6 = tpu.concatenate %0, %1, %2, %3, %4, %5 in 2 : vector<2x14x8xbf16>, vector<2x14x8xbf16>, vector<2x14x8xbf16>, vector<2x14x8xbf16>, vector<2x14x8xbf16>, vector<2x14x8xbf16> -> vector<2x14x48xbf16>
    %c0_15 = arith.constant 0 : index
    %c0_16 = arith.constant 0 : index
    %7 = vector.load %arg3[%c0_15, %c0_16] : memref<48x16xbf16, #tpu.memory_space<vmem>>, vector<48x16xbf16>
    %cst = arith.constant dense<0.000000e+00> : vector<2x14x16xf32>
    %8 = tpu.matmul %6, %7, %cst {dimension_numbers = #tpu.dot_dimension_numbers<[2], [0], [0, 1], [1], [0, 0, 0, 1, 1, 1], [], []>} : vector<2x14x48xbf16>, vector<48x16xbf16>, vector<2x14x16xf32> -> vector<2x14x16xf32>
    %9 = vector.extract_strided_slice %8 {offsets = [0, 0, 0], sizes = [2, 14, 8], strides = [1, 1, 1]} : vector<2x14x16xf32> to vector<2x14x8xf32>
    %10 = vector.extract_strided_slice %8 {offsets = [0, 0, 8], sizes = [2, 14, 8], strides = [1, 1, 1]} : vector<2x14x16xf32> to vector<2x14x8xf32>
    %c0_17 = arith.constant 0 : index
    %c0_18 = arith.constant 0 : index
    %11 = vector.load %arg5[%c0_17, %c0_18] : memref<3x8xf32, #tpu.memory_space<vmem>>, vector<1x8xf32>
    %12 = vector.shape_cast %11 : vector<1x8xf32> to vector<1x1x8xf32>
    %c1_19 = arith.constant 1 : index
    %c0_20 = arith.constant 0 : index
    %13 = vector.load %arg5[%c1_19, %c0_20] : memref<3x8xf32, #tpu.memory_space<vmem>>, vector<1x8xf32>
    %14 = vector.shape_cast %13 : vector<1x8xf32> to vector<1x1x8xf32>
    %c2_21 = arith.constant 2 : index
    %c0_22 = arith.constant 0 : index
    %15 = vector.load %arg5[%c2_21, %c0_22] : memref<3x8xf32, #tpu.memory_space<vmem>>, vector<1x8xf32>
    %16 = vector.shape_cast %15 : vector<1x8xf32> to vector<1x1x8xf32>
    %17 = vector.broadcast %12 : vector<1x1x8xf32> to vector<2x14x8xf32>
    %18 = arith.addf %9, %17 : vector<2x14x8xf32>
    %19 = arith.negf %18 : vector<2x14x8xf32>
    %20 = math.exp %19 : vector<2x14x8xf32>
    %cst_23 = arith.constant 1.000000e+00 : f32
    %21 = vector.broadcast %cst_23 : f32 to vector<2x14x8xf32>
    %22 = arith.addf %21, %20 : vector<2x14x8xf32>
    %23 = arith.divf %21, %22 : vector<2x14x8xf32>
    %24 = vector.broadcast %14 : vector<1x1x8xf32> to vector<2x14x8xf32>
    %25 = arith.addf %10, %24 : vector<2x14x8xf32>
    %26 = arith.negf %25 : vector<2x14x8xf32>
    %27 = math.exp %26 : vector<2x14x8xf32>
    %cst_24 = arith.constant 1.000000e+00 : f32
    %28 = vector.broadcast %cst_24 : f32 to vector<2x14x8xf32>
    %29 = arith.addf %28, %27 : vector<2x14x8xf32>
    %30 = arith.divf %28, %29 : vector<2x14x8xf32>
    %31 = arith.truncf %23 : vector<2x14x8xf32> to vector<2x14x8xbf16>
    %c0_25 = arith.constant 0 : index
    %c0_26 = arith.constant 0 : index
    %32 = vector.load %arg4[%c0_25, %c0_26] : memref<8x8xbf16, #tpu.memory_space<vmem>>, vector<8x8xbf16>
    %cst_27 = arith.constant dense<0.000000e+00> : vector<2x14x8xf32>
    %33 = tpu.matmul %31, %32, %cst_27 {dimension_numbers = #tpu.dot_dimension_numbers<[2], [0], [0, 1], [1], [0, 0, 0, 1, 1, 1], [], []>} : vector<2x14x8xbf16>, vector<8x8xbf16>, vector<2x14x8xf32> -> vector<2x14x8xf32>
    %34 = vector.broadcast %16 : vector<1x1x8xf32> to vector<2x14x8xf32>
    %35 = arith.addf %33, %34 : vector<2x14x8xf32>
    %cst_28 = arith.constant 0.000000e+00 : f32
    %36 = vector.broadcast %cst_28 : f32 to vector<2x14x8xf32>
    %37 = arith.maximumf %35, %36 : vector<2x14x8xf32>
    %c0_29 = arith.constant 0 : index
    %c2_30 = arith.constant 2 : index
    %c0_31 = arith.constant 0 : index
    %38 = vector.load %arg1[%c0_29, %c2_30, %c0_31] : memref<2x16x8xbf16, #tpu.memory_space<vmem>>, vector<2x14x8xbf16>
    %39 = arith.extf %38 : vector<2x14x8xbf16> to vector<2x14x8xf32>
    %40 = arith.addf %39, %37 : vector<2x14x8xf32>
    %41 = arith.truncf %40 : vector<2x14x8xf32> to vector<2x14x8xbf16>
    %c0_32 = arith.constant 0 : index
    %c0_33 = arith.constant 0 : index
    %c0_34 = arith.constant 0 : index
    %42 = vector.load %arg6[%c0_32, %c0_33, %c0_34] : memref<2x14x8xbf16, #tpu.memory_space<vmem>>, vector<2x14x8xbf16>
    tpu.vector_store %arg6[%c0_32, %c0_33, %c0_34], %41 {strides = array<i32>} : memref<2x14x8xbf16, #tpu.memory_space<vmem>>, vector<2x14x8xbf16>,
    %43 = arith.truncf %30 : vector<2x14x8xf32> to vector<2x14x8xbf16>
    %c0_35 = arith.constant 0 : index
    %c0_36 = arith.constant 0 : index
    %c0_37 = arith.constant 0 : index
    %44 = vector.load %arg7[%c0_35, %c0_36, %c0_37] : memref<2x14x8xbf16, #tpu.memory_space<vmem>>, vector<2x14x8xbf16>
    tpu.vector_store %arg7[%c0_35, %c0_36, %c0_37], %43 {strides = array<i32>} : memref<2x14x8xbf16, #tpu.memory_space<vmem>>, vector<2x14x8xbf16>,
    return
  }
  func.func @transform_0(%arg0: i32) -> (i32, i32, i32) {
    %c0_i32 = arith.constant 0 : i32
    %c0_i32_0 = arith.constant 0 : i32
    %c0_i32_1 = arith.constant 0 : i32
    return %arg0, %c0_i32, %c0_i32_0 : i32, i32, i32
  }
  func.func @transform_1(%arg0: i32) -> (i32, i32, i32) {
    %c0_i32 = arith.constant 0 : i32
    %c0_i32_0 = arith.constant 0 : i32
    %c0_i32_1 = arith.constant 0 : i32
    return %arg0, %c0_i32, %c0_i32_0 : i32, i32, i32
  }
  func.func @transform_2(%arg0: i32) -> (i32, i32) {
    %c0_i32 = arith.constant 0 : i32
    %c0_i32_0 = arith.constant 0 : i32
    %c0_i32_1 = arith.constant 0 : i32
    return %c0_i32, %c0_i32_0 : i32, i32
  }
  func.func @transform_3(%arg0: i32) -> (i32, i32) {
    %c0_i32 = arith.constant 0 : i32
    %c0_i32_0 = arith.constant 0 : i32
    %c0_i32_1 = arith.constant 0 : i32
    return %c0_i32, %c0_i32_0 : i32, i32
  }
  func.func @transform_4(%arg0: i32) -> (i32, i32) {
    %c0_i32 = arith.constant 0 : i32
    %c0_i32_0 = arith.constant 0 : i32
    %c0_i32_1 = arith.constant 0 : i32
    return %c0_i32, %c0_i32_0 : i32, i32
  }
  func.func @transform_5(%arg0: i32) -> (i32, i32, i32) {
    %c0_i32 = arith.constant 0 : i32
    %c0_i32_0 = arith.constant 0 : i32
    %c0_i32_1 = arith.constant 0 : i32
    return %arg0, %c0_i32, %c0_i32_0 : i32, i32, i32
  }
  func.func @transform_6(%arg0: i32) -> (i32, i32, i32) {
    %c0_i32 = arith.constant 0 : i32
    %c0_i32_0 = arith.constant 0 : i32
    %c0_i32_1 = arith.constant 0 : i32
    return %arg0, %c0_i32, %c0_i32_0 : i32, i32, i32
  }
}

</mosaic_0001>

<llo_original>
// kernel: tpu_custom_call.1
$region0: #{tpu_custom_call.1}
  #allocation0 [shape = 'u32[]', space=smem, size = 0x4, offset = 0x4, fixed_abs, tag = 'smem constant byte address 0x4 - core index']
  #allocation1 [shape = 'u32[144,128]{1,0:T(1,128)}', space=vmem, size = 0x12000, scoped, tag = 'internal scratch']
  %s0 = inlined_call_operand.vmem [shape: bf16[2,16,8], index: 0, kind: input, shape index: {}]
  %s1 = inlined_call_operand.vmem [shape: bf16[2,16,8], index: 1, kind: input, shape index: {}]
  %s2 = inlined_call_operand.vmem [shape: bf16[48,16], index: 2, kind: input, shape index: {}]
  %s3 = inlined_call_operand.vmem [shape: bf16[8,8], index: 3, kind: input, shape index: {}]
  %s4 = inlined_call_operand.vmem [shape: f32[3,8], index: 4, kind: input, shape index: {}]
  %s5 = inlined_call_operand.vmem [shape: bf16[2,14,8], index: 5, kind: output, shape index: {0}]
  %s6 = inlined_call_operand.vmem [shape: bf16[2,14,8], index: 6, kind: output, shape index: {1}]
  %7 = xla_tuple %s5, %s6
  %s8 = sld [smem:[#allocation0]]
  $region38: #{tpu_custom_call.1} parent=0
    _
  %s10 = ssub.s32 1, %s8
  %s11 = scalar_select 0, %s10, %s8
  // Predicated region
  $region2: #{tpu_custom_call.1} parent=0 // pred_check
    _
  $region3: #{tpu_custom_call.1} parent=0 // pred_check_branch
    %13 = sbr.rel (0) target = $region5
  $region4: #{tpu_custom_call.1} parent=0 // pred_region
    _
  $region5: #{tpu_custom_call.1} parent=0 // pred_fallthru
    _
  // Predicated region
  $region6: #{tpu_custom_call.1} parent=0 // pred_check
    _
  $region7: #{tpu_custom_call.1} parent=0 // pred_check_branch
    %15 = sbr.rel (0) target = $region9
  $region8: #{tpu_custom_call.1} parent=0 // pred_region
    _
  $region9: #{tpu_custom_call.1} parent=0 // pred_fallthru
    _
  // Predicated region
  $region10: #{tpu_custom_call.1} parent=0 // pred_check
    _
  $region11: #{tpu_custom_call.1} parent=0 // pred_check_branch
    %17 = sbr.rel (0) target = $region13
  $region12: #{tpu_custom_call.1} parent=0 // pred_region
    _
  $region13: #{tpu_custom_call.1} parent=0 // pred_fallthru
    _
  // Predicated region
  $region14: #{tpu_custom_call.1} parent=0 // pred_check
    _
  $region15: #{tpu_custom_call.1} parent=0 // pred_check_branch
    %19 = sbr.rel (0) target = $region17
  $region16: #{tpu_custom_call.1} parent=0 // pred_region
    _
  $region17: #{tpu_custom_call.1} parent=0 // pred_fallthru
    _
  // Predicated region
  $region18: #{tpu_custom_call.1} parent=0 // pred_check
    _
  $region19: #{tpu_custom_call.1} parent=0 // pred_check_branch
    %21 = sbr.rel (0) target = $region21
  $region20: #{tpu_custom_call.1} parent=0 // pred_region
    _
  $region21: #{tpu_custom_call.1} parent=0 // pred_fallthru
    _
  %v23 = vld [vmem:[%s0] sm:$0xf]
  %v24 = vld [vmem:[%s0 + $0x4] sm:$0x7]
  %v25 = vld [vmem:[%s0 + $0x8] sm:$0xf]
  %v26 = vld [vmem:[%s0 + $0xc] sm:$0x7]
  %v27 = vld [vmem:[%s0 + $0x4] sm:$0xf]
  %v28 = vld [vmem:[%s0 + $0xc] sm:$0xf]
  %v29 = vld [vmem:[%s0] sm:$0xe]
  %v30 = vld [vmem:[%s0 + $0x8] sm:$0xe]
  %v31 = vld [vmem:[%s1] sm:$0xf]
  %v32 = vld [vmem:[%s1 + $0x4] sm:$0x7]
  %v33 = vld [vmem:[%s1 + $0x8] sm:$0xf]
  %v34 = vld [vmem:[%s1 + $0xc] sm:$0x7]
  %v35 = vld [vmem:[%s1 + $0x4] sm:$0xf]
  %v36 = vld [vmem:[%s1 + $0xc] sm:$0xf]
  %v37 = vld [vmem:[%s1] sm:$0xe]
  %v38 = vld [vmem:[%s1 + $0x8] sm:$0xe]
  %v43 = vunpack.c.l.b16 %v23
  %v44 = vunpack.c.l.b16 %v24
  %v45 = vunpack.c.l.b16 %v25
  %v46 = vunpack.c.l.b16 %v26
  %v47 = vpack.c.b16 %v44, %v43
  %v48 = vpack.c.b16 %v46, %v45
  %v51 = vunpack.c.l.b16 %v27
  %v52 = vunpack.c.l.b16 %v28
  %v53 = vpack.c.b16 %v51, %v43
  %v54 = vpack.c.b16 %v52, %v45
  %v56 = vshrl.u32 %v53, 16
  %v58 = vshll.u32 %v53, 16
  %v60 = vrot.slane %v58, 1
  %v61 = vor.u32 %v56, %v60
  %v63 = vshrl.u32 %v54, 16
  %v65 = vshll.u32 %v54, 16
  %v67 = vrot.slane %v65, 1
  %v68 = vor.u32 %v63, %v67
  %69 = vrot.lane.b32.xlu0 %v61, 8
  %v70 = vpop.permute.xlu0 %69
  %71 = vrot.lane.b32.xlu0 %v68, 8
  %v72 = vpop.permute.xlu0 %71
  %v75 = vunpack.c.l.b16 %v29
  %v76 = vunpack.c.l.b16 %v30
  %v77 = vpack.c.b16 %v51, %v75
  %v78 = vpack.c.b16 %v52, %v76
  %v79 = vrot.slane %v77, 1
  %v80 = vrot.slane %v78, 1
  %81 = vrot.lane.b32.xlu0 %v79, 16
  %v82 = vpop.permute.xlu0 %81
  %83 = vrot.lane.b32.xlu0 %v80, 16
  %v84 = vpop.permute.xlu0 %83
  %v89 = vunpack.c.l.b16 %v31
  %v90 = vunpack.c.l.b16 %v32
  %v91 = vunpack.c.l.b16 %v33
  %v92 = vunpack.c.l.b16 %v34
  %v93 = vpack.c.b16 %v90, %v89
  %v94 = vpack.c.b16 %v92, %v91
  %95 = vrot.lane.b32.xlu0 %v93, 24
  %v96 = vpop.permute.xlu0 %95
  %97 = vrot.lane.b32.xlu0 %v94, 24
  %v98 = vpop.permute.xlu0 %97
  %v101 = vunpack.c.l.b16 %v35
  %v102 = vunpack.c.l.b16 %v36
  %v103 = vpack.c.b16 %v101, %v89
  %v104 = vpack.c.b16 %v102, %v91
  %v106 = vshrl.u32 %v103, 16
  %v108 = vshll.u32 %v103, 16
  %v110 = vrot.slane %v108, 1
  %v111 = vor.u32 %v106, %v110
  %v113 = vshrl.u32 %v104, 16
  %v115 = vshll.u32 %v104, 16
  %v117 = vrot.slane %v115, 1
  %v118 = vor.u32 %v113, %v117
  %119 = vrot.lane.b32.xlu0 %v111, 32
  %v120 = vpop.permute.xlu0 %119
  %121 = vrot.lane.b32.xlu0 %v118, 32
  %v122 = vpop.permute.xlu0 %121
  %v125 = vunpack.c.l.b16 %v37
  %v126 = vunpack.c.l.b16 %v38
  %v127 = vpack.c.b16 %v101, %v125
  %v128 = vpack.c.b16 %v102, %v126
  %v129 = vrot.slane %v127, 1
  %v130 = vrot.slane %v128, 1
  %131 = vrot.lane.b32.xlu0 %v129, 40
  %v132 = vpop.permute.xlu0 %131
  %133 = vrot.lane.b32.xlu0 %v130, 40
  %v134 = vpop.permute.xlu0 %133
  %vm135 = vcmask 64512
  %v138 = vsel %vm135, %v47, %v70
  %v141 = vsel %vm135, %v48, %v72
  %vm142 = vcmask 130048
  %v144 = vsel %vm142, %v138, %v82
  %v146 = vsel %vm142, %v141, %v84
  %vm147 = vcmask 195584
  %v149 = vsel %vm147, %v144, %v96
  %v151 = vsel %vm147, %v146, %v98
  %vm152 = vcmask 261120
  %v154 = vsel %vm152, %v149, %v120
  %v156 = vsel %vm152, %v151, %v122
  %vm157 = vcmask 326656
  %v159 = vsel %vm157, %v154, %v132
  %v161 = vsel %vm157, %v156, %v134
  %v162 = vld [vmem:[%s2] sm:$0xf]
  %v163 = vld [vmem:[%s2 + $0x4] sm:$0xf]
  %v164 = vld [vmem:[%s2 + $0x8] sm:$0xf]
  %v165 = vld [vmem:[%s2 + $0xc] sm:$0xf]
  %v166 = vld [vmem:[%s2 + $0x10] sm:$0xf]
  %v167 = vld [vmem:[%s2 + $0x14] sm:$0xf]
  %v170 = vcombine.high %v159, %v159
  %v172 = vunpack.c.l.s4 1966171168
  %v173 = vunpack.c.0.s8 %v172
  %v174 = vlaneseq
  %v175 = vshrl.u32 %v174, 7
  %v176 = vsub.s32 %v173, %v175
  %v177 = vrot.slane %v159, %v176
  %v179 = vunpack.c.l.s4 1966171168
  %v180 = vunpack.c.0.s8 %v179
  %v181 = vlaneseq
  %v182 = vshrl.u32 %v181, 7
  %v183 = vsub.s32 %v180, %v182
  %v184 = vrot.slane %v170, %v183
  %v185 = vcombine.high %v177, %v177
  %v186 = vcombine.high %v184, %v184
  %v188 = vunpack.c.l.s4 1966171168
  %v189 = vunpack.c.0.s8 %v188
  %v190 = vlaneseq
  %v191 = vshrl.u32 %v190, 7
  %v192 = vsub.s32 %v189, %v191
  %v193 = vrot.slane %v177, %v192
  %v195 = vunpack.c.l.s4 1966171168
  %v196 = vunpack.c.0.s8 %v195
  %v197 = vlaneseq
  %v198 = vshrl.u32 %v197, 7
  %v199 = vsub.s32 %v196, %v198
  %v200 = vrot.slane %v184, %v199
  %v202 = vunpack.c.l.s4 1966171168
  %v203 = vunpack.c.0.s8 %v202
  %v204 = vlaneseq
  %v205 = vshrl.u32 %v204, 7
  %v206 = vsub.s32 %v203, %v205
  %v207 = vrot.slane %v185, %v206
  %v209 = vunpack.c.l.s4 1966171168
  %v210 = vunpack.c.0.s8 %v209
  %v211 = vlaneseq
  %v212 = vshrl.u32 %v211, 7
  %v213 = vsub.s32 %v210, %v212
  %v214 = vrot.slane %v186, %v213
  %v215 = vcombine.high %v193, %v193
  %v216 = vcombine.high %v200, %v200
  %v217 = vcombine.high %v207, %v207
  %v218 = vcombine.high %v161, %v161
  %v220 = vunpack.c.l.s4 1966171168
  %v221 = vunpack.c.0.s8 %v220
  %v222 = vlaneseq
  %v223 = vshrl.u32 %v222, 7
  %v224 = vsub.s32 %v221, %v223
  %v225 = vrot.slane %v161, %v224
  %v227 = vunpack.c.l.s4 1966171168
  %v228 = vunpack.c.0.s8 %v227
  %v229 = vlaneseq
  %v230 = vshrl.u32 %v229, 7
  %v231 = vsub.s32 %v228, %v230
  %v232 = vrot.slane %v218, %v231
  %v233 = vcombine.high %v225, %v225
  %v234 = vcombine.high %v232, %v232
  %v236 = vunpack.c.l.s4 1966171168
  %v237 = vunpack.c.0.s8 %v236
  %v238 = vlaneseq
  %v239 = vshrl.u32 %v238, 7
  %v240 = vsub.s32 %v237, %v239
  %v241 = vrot.slane %v225, %v240
  %v243 = vunpack.c.l.s4 1966171168
  %v244 = vunpack.c.0.s8 %v243
  %v245 = vlaneseq
  %v246 = vshrl.u32 %v245, 7
  %v247 = vsub.s32 %v244, %v246
  %v248 = vrot.slane %v232, %v247
  %v250 = vunpack.c.l.s4 1966171168
  %v251 = vunpack.c.0.s8 %v250
  %v252 = vlaneseq
  %v253 = vshrl.u32 %v252, 7
  %v254 = vsub.s32 %v251, %v253
  %v255 = vrot.slane %v233, %v254
  %v257 = vunpack.c.l.s4 1966171168
  %v258 = vunpack.c.0.s8 %v257
  %v259 = vlaneseq
  %v260 = vshrl.u32 %v259, 7
  %v261 = vsub.s32 %v258, %v260
  %v262 = vrot.slane %v234, %v261
  %v263 = vcombine.high %v241, %v241
  %v264 = vcombine.high %v248, %v248
  %v265 = vcombine.high %v255, %v255
  %v266 = vcombine.low %v193, %v207
  %v267 = vcombine.low %v215, %v217
  %v268 = vcombine.low %v200, %v214
  %v269 = vcombine.low %v216, %v241
  %v271 = vunpack.c.l.s4 1966171168
  %v272 = vunpack.c.0.s8 %v271
  %v273 = vlaneseq
  %v274 = vshrl.u32 %v273, 7
  %v275 = vsub.s32 %v272, %v274
  %v276 = vrot.slane %v266, %v275
  %v278 = vunpack.c.l.s4 1966171168
  %v279 = vunpack.c.0.s8 %v278
  %v280 = vlaneseq
  %v281 = vshrl.u32 %v280, 7
  %v282 = vsub.s32 %v279, %v281
  %v283 = vrot.slane %v267, %v282
  %v285 = vunpack.c.l.s4 1966171168
  %v286 = vunpack.c.0.s8 %v285
  %v287 = vlaneseq
  %v288 = vshrl.u32 %v287, 7
  %v289 = vsub.s32 %v286, %v288
  %v290 = vrot.slane %v268, %v289
  %v292 = vunpack.c.l.s4 1966171168
  %v293 = vunpack.c.0.s8 %v292
  %v294 = vlaneseq
  %v295 = vshrl.u32 %v294, 7
  %v296 = vsub.s32 %v293, %v295
  %v297 = vrot.slane %v269, %v296
  %v298 = vcombine.low %v276, %v283
  %v299 = vcombine.low %v290, %v297
  %v301 = vunpack.c.l.s4 1966171168
  %v302 = vunpack.c.0.s8 %v301
  %v303 = vlaneseq
  %v304 = vshrl.u32 %v303, 7
  %v305 = vsub.s32 %v302, %v304
  %v306 = vrot.slane %v298, %v305
  %v308 = vunpack.c.l.s4 1966171168
  %v309 = vunpack.c.0.s8 %v308
  %v310 = vlaneseq
  %v311 = vshrl.u32 %v310, 7
  %v312 = vsub.s32 %v309, %v311
  %v313 = vrot.slane %v299, %v312
  %v314 = vcombine.low %v306, %v313
  %v315 = vcombine.low %v255, %v263
  %v316 = vcombine.low %v265, %v248
  %v317 = vcombine.low %v262, %v264
  %v319 = vunpack.c.l.s4 1966171168
  %v320 = vunpack.c.0.s8 %v319
  %v321 = vlaneseq
  %v322 = vshrl.u32 %v321, 7
  %v323 = vsub.s32 %v320, %v322
  %v324 = vrot.slane %v315, %v323
  %v326 = vunpack.c.l.s4 1966171168
  %v327 = vunpack.c.0.s8 %v326
  %v328 = vlaneseq
  %v329 = vshrl.u32 %v328, 7
  %v330 = vsub.s32 %v327, %v329
  %v331 = vrot.slane %v316, %v330
  %v333 = vunpack.c.l.s4 1966171168
  %v334 = vunpack.c.0.s8 %v333
  %v335 = vlaneseq
  %v336 = vshrl.u32 %v335, 7
  %v337 = vsub.s32 %v334, %v336
  %v338 = vrot.slane %v317, %v337
  %v339 = vcombine.low %v324, %v331
  %v341 = vunpack.c.l.s4 1966171168
  %v342 = vunpack.c.0.s8 %v341
  %v343 = vlaneseq
  %v344 = vshrl.u32 %v343, 7
  %v345 = vsub.s32 %v342, %v344
  %v346 = vrot.slane %v339, %v345
  %v348 = vunpack.c.l.s4 1966171168
  %v349 = vunpack.c.0.s8 %v348
  %v350 = vlaneseq
  %v351 = vshrl.u32 %v350, 7
  %v352 = vsub.s32 %v349, %v351
  %v353 = vrot.slane %v338, %v352
  %v354 = vcombine.low %v346, %v353
  %v361 = vunpack.c.l.b16 %v162
  %v362 = vunpack.c.l.b16 %v163
  %v363 = vunpack.c.l.b16 %v164
  %v364 = vunpack.c.l.b16 %v165
  %v365 = vunpack.c.l.b16 %v166
  %v366 = vunpack.c.l.b16 %v167
  %v367 = vpack.c.b16 %v362, %v361
  %v368 = vpack.c.b16 %v364, %v363
  %v369 = vpack.c.b16 %v366, %v365
  %vm373 = vcmask 392192
  %v375 = vsel %vm373, %v314, 0
  %v378 = vsel %vm373, %v354, 0
  %380 = vmatprep.subr.bf16.mxu0 0
  %381 = vmatpush1.bf16.msra.mxu0 0
  %382 = vmatprep.subr.bf16.mxu0 0
  %383 = vmatpush1.bf16.msra.mxu0 0
  %384 = vmatprep.subr.bf16.mxu0 0
  %385 = vmatpush1.bf16.msra.mxu0 0
  %386 = vmatprep.subr.bf16.mxu0 0
  %387 = vmatpush1.bf16.msra.mxu0 0
  %388 = vmatprep.subr.bf16.mxu0 0
  %389 = vmatpush1.bf16.msra.mxu0 0
  %390 = vmatprep.subr.bf16.mxu0 0
  %391 = vmatpush1.bf16.msra.mxu0 %v369
  %392 = vmatprep.subr.bf16.mxu0 0
  %393 = vmatpush1.bf16.msra.mxu0 %v368
  %394 = vmatprep.subr.bf16.mxu0 0
  %395 = vmatpush1.bf16.msra.mxu0 %v367
  %396 = vmatprep.subr.bf16.mxu0 0
  %397 = vmatpush2.bf16.msra.mxu0 0
  %398 = vmatprep.subr.bf16.mxu0 0
  %399 = vmatpush2.bf16.msra.mxu0 0
  %400 = vmatprep.subr.bf16.mxu0 0
  %401 = vmatpush2.bf16.msra.mxu0 0
  %402 = vmatprep.subr.bf16.mxu0 0
  %403 = vmatpush2.bf16.msra.mxu0 0
  %404 = vmatprep.subr.bf16.mxu0 0
  %405 = vmatpush2.bf16.msra.mxu0 0
  %406 = vmatprep.subr.bf16.mxu0 0
  %407 = vmatpush2.bf16.msra.mxu0 0
  %408 = vmatprep.subr.bf16.mxu0 0
  %409 = vmatpush2.bf16.msra.mxu0 0
  %410 = vmatprep.subr.bf16.mxu0 0
  %411 = vmatpush2.bf16.msra.mxu0 0
  %412 = vmatprep.mubr.bf16.mxu0 0
  %413 = vmatmul.mubr.bf16.gmra.mxu0 %v375
  %v414 = vpop.f32.mrf.mxu0
  %v415 = vadd.f32 0.0, %v414
  %v416 = vpop.f32.mrf.mxu0
  %v417 = vpop.f32.mrf.mxu0
  %v418 = vadd.f32 0.0, %v417
  %v419 = vpop.f32.mrf.mxu0
  %420 = vmatprep.mubr.bf16.mxu0 0
  %421 = vmatmul.mubr.bf16.gmra.mxu0 %v378
  %v422 = vpop.f32.mrf.mxu0
  %v423 = vadd.f32 0.0, %v422
  %v424 = vpop.f32.mrf.mxu0
  %v425 = vpop.f32.mrf.mxu0
  %v426 = vadd.f32 0.0, %v425
  %v427 = vpop.f32.mrf.mxu0
  %428 = vdwg.mxu0
  %v433 = vcombine.high %v415, %v415
  %v435 = vunpack.c.l.s4 1983009808
  %v436 = vunpack.c.0.s8 %v435
  %v437 = vlaneseq
  %v438 = vshrl.u32 %v437, 7
  %v439 = vsub.s32 %v436, %v438
  %v440 = vrot.slane %v415, %v439
  %v442 = vunpack.c.l.s4 1983009808
  %v443 = vunpack.c.0.s8 %v442
  %v444 = vlaneseq
  %v445 = vshrl.u32 %v444, 7
  %v446 = vsub.s32 %v443, %v445
  %v447 = vrot.slane %v433, %v446
  %v448 = vcombine.high %v440, %v440
  %v449 = vcombine.high %v447, %v447
  %v450 = vcombine.high %v418, %v418
  %v452 = vunpack.c.l.s4 1983009808
  %v453 = vunpack.c.0.s8 %v452
  %v454 = vlaneseq
  %v455 = vshrl.u32 %v454, 7
  %v456 = vsub.s32 %v453, %v455
  %v457 = vrot.slane %v418, %v456
  %v459 = vunpack.c.l.s4 1983009808
  %v460 = vunpack.c.0.s8 %v459
  %v461 = vlaneseq
  %v462 = vshrl.u32 %v461, 7
  %v463 = vsub.s32 %v460, %v462
  %v464 = vrot.slane %v450, %v463
  %v465 = vcombine.high %v457, %v457
  %v466 = vcombine.high %v464, %v464
  %v467 = vcombine.high %v423, %v423
  %v469 = vunpack.c.l.s4 1983009808
  %v470 = vunpack.c.0.s8 %v469
  %v471 = vlaneseq
  %v472 = vshrl.u32 %v471, 7
  %v473 = vsub.s32 %v470, %v472
  %v474 = vrot.slane %v423, %v473
  %v476 = vunpack.c.l.s4 1983009808
  %v477 = vunpack.c.0.s8 %v476
  %v478 = vlaneseq
  %v479 = vshrl.u32 %v478, 7
  %v480 = vsub.s32 %v477, %v479
  %v481 = vrot.slane %v467, %v480
  %v482 = vcombine.high %v474, %v474
  %v483 = vcombine.high %v481, %v481
  %v485 = vunpack.c.l.s4 1983009808
  %v486 = vunpack.c.0.s8 %v485
  %v487 = vlaneseq
  %v488 = vshrl.u32 %v487, 7
  %v489 = vsub.s32 %v486, %v488
  %v490 = vrot.slane %v426, %v489
  %v491 = vcombine.high %v490, %v490
  %v506 = vld [vmem:[%s4] sm:$0x1]
  %v507 = vld [vmem:[%s4 + $0x1] sm:$0x1]
  %v508 = vld [vmem:[%s4 + $0x2] sm:$0x1]
  %v509 = vlaneseq
  %v510 = vshrl.u32 %v509, 7
  %v511 = vsub.s32 0, %v510
  %v512 = vrot.slane %v506, %v511
  %v514 = vcombine.high %v512, %v512
  %v516 = vunpack.c.l.s4 1983009808
  %v517 = vunpack.c.0.s8 %v516
  %v518 = vlaneseq
  %v519 = vshrl.u32 %v518, 7
  %v520 = vsub.s32 %v517, %v519
  %v521 = vrot.slane %v512, %v520
  %v523 = vunpack.c.l.s4 1983009808
  %v524 = vunpack.c.0.s8 %v523
  %v525 = vlaneseq
  %v526 = vshrl.u32 %v525, 7
  %v527 = vsub.s32 %v524, %v526
  %v528 = vrot.slane %v514, %v527
  %v529 = vcombine.high %v521, %v521
  %v530 = vcombine.high %v528, %v528
  %v535 = vadd.f32 %v440, %v521
  %v536 = vadd.f32 %v448, %v529
  %v537 = vadd.f32 %v447, %v528
  %v538 = vadd.f32 %v449, %v530
  %v539 = vadd.f32 %v457, %v521
  %v540 = vadd.f32 %v465, %v529
  %v541 = vadd.f32 %v464, %v528
  %v542 = vadd.f32 %v466, %v521
  %v543 = vadd.f32 %v474, %v529
  %v544 = vadd.f32 %v482, %v528
  %v545 = vadd.f32 %v481, %v530
  %v546 = vadd.f32 %v483, %v521
  %v547 = vadd.f32 %v490, %v529
  %v548 = vadd.f32 %v491, %v528
  %v549 = vxor.u32 %v535, 2147483648
  %v550 = vxor.u32 %v536, 2147483648
  %v551 = vxor.u32 %v537, 2147483648
  %v552 = vxor.u32 %v538, 2147483648
  %v553 = vxor.u32 %v539, 2147483648
  %v554 = vxor.u32 %v540, 2147483648
  %v555 = vxor.u32 %v541, 2147483648
  %v556 = vxor.u32 %v542, 2147483648
  %v557 = vxor.u32 %v543, 2147483648
  %v558 = vxor.u32 %v544, 2147483648
  %v559 = vxor.u32 %v545, 2147483648
  %v560 = vxor.u32 %v546, 2147483648
  %v561 = vxor.u32 %v547, 2147483648
  %v562 = vxor.u32 %v548, 2147483648
  %v563 = vmul.f32 %v549, 1.442695
  %v564 = vpow.pop %v563
  %v565 = vmul.f32 %v550, 1.442695
  %v566 = vpow.pop %v565
  %v567 = vmul.f32 %v551, 1.442695
  %v568 = vpow.pop %v567
  %v569 = vmul.f32 %v552, 1.442695
  %v570 = vpow.pop %v569
  %v571 = vmul.f32 %v553, 1.442695
  %v572 = vpow.pop %v571
  %v573 = vmul.f32 %v554, 1.442695
  %v574 = vpow.pop %v573
  %v575 = vmul.f32 %v555, 1.442695
  %v576 = vpow.pop %v575
  %v577 = vmul.f32 %v556, 1.442695
  %v578 = vpow.pop %v577
  %v579 = vmul.f32 %v557, 1.442695
  %v580 = vpow.pop %v579
  %v581 = vmul.f32 %v558, 1.442695
  %v582 = vpow.pop %v581
  %v583 = vmul.f32 %v559, 1.442695
  %v584 = vpow.pop %v583
  %v585 = vmul.f32 %v560, 1.442695
  %v586 = vpow.pop %v585
  %v587 = vmul.f32 %v561, 1.442695
  %v588 = vpow.pop %v587
  %v589 = vmul.f32 %v562, 1.442695
  %v590 = vpow.pop %v589
  %v591 = vadd.f32 %v564, 1.0
  %v592 = vadd.f32 %v566, 1.0
  %v593 = vadd.f32 %v568, 1.0
  %v594 = vadd.f32 %v570, 1.0
  %v595 = vadd.f32 %v572, 1.0
  %v596 = vadd.f32 %v574, 1.0
  %v597 = vadd.f32 %v576, 1.0
  %v598 = vadd.f32 %v578, 1.0
  %v599 = vadd.f32 %v580, 1.0
  %v600 = vadd.f32 %v582, 1.0
  %v601 = vadd.f32 %v584, 1.0
  %v602 = vadd.f32 %v586, 1.0
  %v603 = vadd.f32 %v588, 1.0
  %v604 = vadd.f32 %v590, 1.0
  %v605 = vrcp.pop %v591
  %v606 = vmul.f32 1.0, %v605
  %v607 = vrcp.pop %v592
  %v608 = vmul.f32 1.0, %v607
  %v609 = vrcp.pop %v593
  %v610 = vmul.f32 1.0, %v609
  %v611 = vrcp.pop %v594
  %v612 = vmul.f32 1.0, %v611
  %v613 = vrcp.pop %v595
  %v614 = vmul.f32 1.0, %v613
  %v615 = vrcp.pop %v596
  %v616 = vmul.f32 1.0, %v615
  %v617 = vrcp.pop %v597
  %v618 = vmul.f32 1.0, %v617
  %v619 = vrcp.pop %v598
  %v620 = vmul.f32 1.0, %v619
  %v621 = vrcp.pop %v599
  %v622 = vmul.f32 1.0, %v621
  %v623 = vrcp.pop %v600
  %v624 = vmul.f32 1.0, %v623
  %v625 = vrcp.pop %v601
  %v626 = vmul.f32 1.0, %v625
  %v627 = vrcp.pop %v602
  %v628 = vmul.f32 1.0, %v627
  %v629 = vrcp.pop %v603
  %v630 = vmul.f32 1.0, %v629
  %v631 = vrcp.pop %v604
  %v632 = vmul.f32 1.0, %v631
  %v633 = vlaneseq
  %v634 = vshrl.u32 %v633, 7
  %v635 = vsub.s32 0, %v634
  %v636 = vrot.slane %v507, %v635
  %v638 = vcombine.high %v636, %v636
  %v640 = vunpack.c.l.s4 1983009808
  %v641 = vunpack.c.0.s8 %v640
  %v642 = vlaneseq
  %v643 = vshrl.u32 %v642, 7
  %v644 = vsub.s32 %v641, %v643
  %v645 = vrot.slane %v636, %v644
  %v647 = vunpack.c.l.s4 1983009808
  %v648 = vunpack.c.0.s8 %v647
  %v649 = vlaneseq
  %v650 = vshrl.u32 %v649, 7
  %v651 = vsub.s32 %v648, %v650
  %v652 = vrot.slane %v638, %v651
  %v653 = vcombine.high %v645, %v645
  %v654 = vcombine.high %v652, %v652
  %655 = vrot.lane.b32.xlu0 %v645, 8
  %v656 = vpop.permute.xlu0 %655
  %657 = vrot.lane.b32.xlu0 %v653, 8
  %v658 = vpop.permute.xlu0 %657
  %659 = vrot.lane.b32.xlu0 %v652, 8
  %v660 = vpop.permute.xlu0 %659
  %661 = vrot.lane.b32.xlu0 %v654, 8
  %v662 = vpop.permute.xlu0 %661
  %v667 = vadd.f32 %v440, %v656
  %v668 = vadd.f32 %v448, %v658
  %v669 = vadd.f32 %v447, %v660
  %v670 = vadd.f32 %v449, %v662
  %v671 = vadd.f32 %v457, %v656
  %v672 = vadd.f32 %v465, %v658
  %v673 = vadd.f32 %v464, %v660
  %v674 = vadd.f32 %v466, %v656
  %v675 = vadd.f32 %v474, %v658
  %v676 = vadd.f32 %v482, %v660
  %v677 = vadd.f32 %v481, %v662
  %v678 = vadd.f32 %v483, %v656
  %v679 = vadd.f32 %v490, %v658
  %v680 = vadd.f32 %v491, %v660
  %v681 = vxor.u32 %v667, 2147483648
  %v682 = vxor.u32 %v668, 2147483648
  %v683 = vxor.u32 %v669, 2147483648
  %v684 = vxor.u32 %v670, 2147483648
  %v685 = vxor.u32 %v671, 2147483648
  %v686 = vxor.u32 %v672, 2147483648
  %v687 = vxor.u32 %v673, 2147483648
  %v688 = vxor.u32 %v674, 2147483648
  %v689 = vxor.u32 %v675, 2147483648
  %v690 = vxor.u32 %v676, 2147483648
  %v691 = vxor.u32 %v677, 2147483648
  %v692 = vxor.u32 %v678, 2147483648
  %v693 = vxor.u32 %v679, 2147483648
  %v694 = vxor.u32 %v680, 2147483648
  %v695 = vmul.f32 %v681, 1.442695
  %v696 = vpow.pop %v695
  %v697 = vmul.f32 %v682, 1.442695
  %v698 = vpow.pop %v697
  %v699 = vmul.f32 %v683, 1.442695
  %v700 = vpow.pop %v699
  %v701 = vmul.f32 %v684, 1.442695
  %v702 = vpow.pop %v701
  %v703 = vmul.f32 %v685, 1.442695
  %v704 = vpow.pop %v703
  %v705 = vmul.f32 %v686, 1.442695
  %v706 = vpow.pop %v705
  %v707 = vmul.f32 %v687, 1.442695
  %v708 = vpow.pop %v707
  %v709 = vmul.f32 %v688, 1.442695
  %v710 = vpow.pop %v709
  %v711 = vmul.f32 %v689, 1.442695
  %v712 = vpow.pop %v711
  %v713 = vmul.f32 %v690, 1.442695
  %v714 = vpow.pop %v713
  %v715 = vmul.f32 %v691, 1.442695
  %v716 = vpow.pop %v715
  %v717 = vmul.f32 %v692, 1.442695
  %v718 = vpow.pop %v717
  %v719 = vmul.f32 %v693, 1.442695
  %v720 = vpow.pop %v719
  %v721 = vmul.f32 %v694, 1.442695
  %v722 = vpow.pop %v721
  %v723 = vadd.f32 %v696, 1.0
  %v724 = vadd.f32 %v698, 1.0
  %v725 = vadd.f32 %v700, 1.0
  %v726 = vadd.f32 %v702, 1.0
  %v727 = vadd.f32 %v704, 1.0
  %v728 = vadd.f32 %v706, 1.0
  %v729 = vadd.f32 %v708, 1.0
  %v730 = vadd.f32 %v710, 1.0
  %v731 = vadd.f32 %v712, 1.0
  %v732 = vadd.f32 %v714, 1.0
  %v733 = vadd.f32 %v716, 1.0
  %v734 = vadd.f32 %v718, 1.0
  %v735 = vadd.f32 %v720, 1.0
  %v736 = vadd.f32 %v722, 1.0
  %v737 = vrcp.pop %v723
  %v738 = vmul.f32 1.0, %v737
  %v739 = vrcp.pop %v724
  %v740 = vmul.f32 1.0, %v739
  %v741 = vrcp.pop %v725
  %v742 = vmul.f32 1.0, %v741
  %v743 = vrcp.pop %v726
  %v744 = vmul.f32 1.0, %v743
  %v745 = vrcp.pop %v727
  %v746 = vmul.f32 1.0, %v745
  %v747 = vrcp.pop %v728
  %v748 = vmul.f32 1.0, %v747
  %v749 = vrcp.pop %v729
  %v750 = vmul.f32 1.0, %v749
  %v751 = vrcp.pop %v730
  %v752 = vmul.f32 1.0, %v751
  %v753 = vrcp.pop %v731
  %v754 = vmul.f32 1.0, %v753
  %v755 = vrcp.pop %v732
  %v756 = vmul.f32 1.0, %v755
  %v757 = vrcp.pop %v733
  %v758 = vmul.f32 1.0, %v757
  %v759 = vrcp.pop %v734
  %v760 = vmul.f32 1.0, %v759
  %v761 = vrcp.pop %v735
  %v762 = vmul.f32 1.0, %v761
  %v763 = vrcp.pop %v736
  %v764 = vmul.f32 1.0, %v763
  %v779 = vcombine.low %v606, %v608
  %v780 = vcombine.low %v610, %v612
  %v782 = vunpack.c.l.s4 1983009808
  %v783 = vunpack.c.0.s8 %v782
  %v784 = vlaneseq
  %v785 = vshrl.u32 %v784, 7
  %v786 = vsub.s32 %v783, %v785
  %v787 = vrot.slane %v779, %v786
  %v789 = vunpack.c.l.s4 1983009808
  %v790 = vunpack.c.0.s8 %v789
  %v791 = vlaneseq
  %v792 = vshrl.u32 %v791, 7
  %v793 = vsub.s32 %v790, %v792
  %v794 = vrot.slane %v780, %v793
  %v795 = vcombine.low %v787, %v794
  %v796 = vcombine.low %v614, %v616
  %v798 = vunpack.c.l.s4 1983009808
  %v799 = vunpack.c.0.s8 %v798
  %v800 = vlaneseq
  %v801 = vshrl.u32 %v800, 7
  %v802 = vsub.s32 %v799, %v801
  %v803 = vrot.slane %v796, %v802
  %v805 = vunpack.c.l.s4 1983009808
  %v806 = vunpack.c.0.s8 %v805
  %v807 = vlaneseq
  %v808 = vshrl.u32 %v807, 7
  %v809 = vsub.s32 %v806, %v808
  %v810 = vrot.slane %v618, %v809
  %v811 = vcombine.low %v803, %v810
  %v812 = vcombine.low %v620, %v622
  %v813 = vcombine.low %v624, %v626
  %v815 = vunpack.c.l.s4 1983009808
  %v816 = vunpack.c.0.s8 %v815
  %v817 = vlaneseq
  %v818 = vshrl.u32 %v817, 7
  %v819 = vsub.s32 %v816, %v818
  %v820 = vrot.slane %v812, %v819
  %v822 = vunpack.c.l.s4 1983009808
  %v823 = vunpack.c.0.s8 %v822
  %v824 = vlaneseq
  %v825 = vshrl.u32 %v824, 7
  %v826 = vsub.s32 %v823, %v825
  %v827 = vrot.slane %v813, %v826
  %v828 = vcombine.low %v820, %v827
  %v829 = vcombine.low %v628, %v630
  %v831 = vunpack.c.l.s4 1983009808
  %v832 = vunpack.c.0.s8 %v831
  %v833 = vlaneseq
  %v834 = vshrl.u32 %v833, 7
  %v835 = vsub.s32 %v832, %v834
  %v836 = vrot.slane %v829, %v835
  %v838 = vunpack.c.l.s4 1983009808
  %v839 = vunpack.c.0.s8 %v838
  %v840 = vlaneseq
  %v841 = vshrl.u32 %v840, 7
  %v842 = vsub.s32 %v839, %v841
  %v843 = vrot.slane %v632, %v842
  %v844 = vcombine.low %v836, %v843
  %v849 = vpack.c.bf16 %v811, %v795
  %v850 = vpack.c.bf16 %v844, %v828
  %v851 = vld [vmem:[%s3] sm:$0xf]
  %v852 = vlaneseq
  %v853 = vshrl.u32 %v852, 7
  %v854 = vsub.s32 0, %v853
  %v855 = vrot.slane %v508, %v854
  %v858 = vcombine.high %v849, %v849
  %v860 = vunpack.c.l.s4 1966171168
  %v861 = vunpack.c.0.s8 %v860
  %v862 = vlaneseq
  %v863 = vshrl.u32 %v862, 7
  %v864 = vsub.s32 %v861, %v863
  %v865 = vrot.slane %v849, %v864
  %v867 = vunpack.c.l.s4 1966171168
  %v868 = vunpack.c.0.s8 %v867
  %v869 = vlaneseq
  %v870 = vshrl.u32 %v869, 7
  %v871 = vsub.s32 %v868, %v870
  %v872 = vrot.slane %v858, %v871
  %v873 = vcombine.high %v865, %v865
  %v874 = vcombine.high %v872, %v872
  %v876 = vunpack.c.l.s4 1966171168
  %v877 = vunpack.c.0.s8 %v876
  %v878 = vlaneseq
  %v879 = vshrl.u32 %v878, 7
  %v880 = vsub.s32 %v877, %v879
  %v881 = vrot.slane %v865, %v880
  %v883 = vunpack.c.l.s4 1966171168
  %v884 = vunpack.c.0.s8 %v883
  %v885 = vlaneseq
  %v886 = vshrl.u32 %v885, 7
  %v887 = vsub.s32 %v884, %v886
  %v888 = vrot.slane %v872, %v887
  %v890 = vunpack.c.l.s4 1966171168
  %v891 = vunpack.c.0.s8 %v890
  %v892 = vlaneseq
  %v893 = vshrl.u32 %v892, 7
  %v894 = vsub.s32 %v891, %v893
  %v895 = vrot.slane %v873, %v894
  %v897 = vunpack.c.l.s4 1966171168
  %v898 = vunpack.c.0.s8 %v897
  %v899 = vlaneseq
  %v900 = vshrl.u32 %v899, 7
  %v901 = vsub.s32 %v898, %v900
  %v902 = vrot.slane %v874, %v901
  %v903 = vcombine.high %v881, %v881
  %v904 = vcombine.high %v888, %v888
  %v905 = vcombine.high %v895, %v895
  %v906 = vcombine.high %v850, %v850
  %v908 = vunpack.c.l.s4 1966171168
  %v909 = vunpack.c.0.s8 %v908
  %v910 = vlaneseq
  %v911 = vshrl.u32 %v910, 7
  %v912 = vsub.s32 %v909, %v911
  %v913 = vrot.slane %v850, %v912
  %v915 = vunpack.c.l.s4 1966171168
  %v916 = vunpack.c.0.s8 %v915
  %v917 = vlaneseq
  %v918 = vshrl.u32 %v917, 7
  %v919 = vsub.s32 %v916, %v918
  %v920 = vrot.slane %v906, %v919
  %v921 = vcombine.high %v913, %v913
  %v922 = vcombine.high %v920, %v920
  %v924 = vunpack.c.l.s4 1966171168
  %v925 = vunpack.c.0.s8 %v924
  %v926 = vlaneseq
  %v927 = vshrl.u32 %v926, 7
  %v928 = vsub.s32 %v925, %v927
  %v929 = vrot.slane %v913, %v928
  %v931 = vunpack.c.l.s4 1966171168
  %v932 = vunpack.c.0.s8 %v931
  %v933 = vlaneseq
  %v934 = vshrl.u32 %v933, 7
  %v935 = vsub.s32 %v932, %v934
  %v936 = vrot.slane %v920, %v935
  %v938 = vunpack.c.l.s4 1966171168
  %v939 = vunpack.c.0.s8 %v938
  %v940 = vlaneseq
  %v941 = vshrl.u32 %v940, 7
  %v942 = vsub.s32 %v939, %v941
  %v943 = vrot.slane %v921, %v942
  %v945 = vunpack.c.l.s4 1966171168
  %v946 = vunpack.c.0.s8 %v945
  %v947 = vlaneseq
  %v948 = vshrl.u32 %v947, 7
  %v949 = vsub.s32 %v946, %v948
  %v950 = vrot.slane %v922, %v949
  %v951 = vcombine.high %v929, %v929
  %v952 = vcombine.high %v936, %v936
  %v953 = vcombine.high %v943, %v943
  %v955 = vcombine.high %v855, %v855
  %v957 = vunpack.c.l.s4 1983009808
  %v958 = vunpack.c.0.s8 %v957
  %v959 = vlaneseq
  %v960 = vshrl.u32 %v959, 7
  %v961 = vsub.s32 %v958, %v960
  %v962 = vrot.slane %v855, %v961
  %v964 = vunpack.c.l.s4 1983009808
  %v965 = vunpack.c.0.s8 %v964
  %v966 = vlaneseq
  %v967 = vshrl.u32 %v966, 7
  %v968 = vsub.s32 %v965, %v967
  %v969 = vrot.slane %v955, %v968
  %v970 = vcombine.high %v962, %v962
  %v971 = vcombine.high %v969, %v969
  %v972 = vcombine.low %v881, %v895
  %v973 = vcombine.low %v903, %v905
  %v974 = vcombine.low %v888, %v902
  %v975 = vcombine.low %v904, %v929
  %v977 = vunpack.c.l.s4 1966171168
  %v978 = vunpack.c.0.s8 %v977
  %v979 = vlaneseq
  %v980 = vshrl.u32 %v979, 7
  %v981 = vsub.s32 %v978, %v980
  %v982 = vrot.slane %v972, %v981
  %v984 = vunpack.c.l.s4 1966171168
  %v985 = vunpack.c.0.s8 %v984
  %v986 = vlaneseq
  %v987 = vshrl.u32 %v986, 7
  %v988 = vsub.s32 %v985, %v987
  %v989 = vrot.slane %v973, %v988
  %v991 = vunpack.c.l.s4 1966171168
  %v992 = vunpack.c.0.s8 %v991
  %v993 = vlaneseq
  %v994 = vshrl.u32 %v993, 7
  %v995 = vsub.s32 %v992, %v994
  %v996 = vrot.slane %v974, %v995
  %v998 = vunpack.c.l.s4 1966171168
  %v999 = vunpack.c.0.s8 %v998
  %v1000 = vlaneseq
  %v1001 = vshrl.u32 %v1000, 7
  %v1002 = vsub.s32 %v999, %v1001
  %v1003 = vrot.slane %v975, %v1002
  %v1004 = vcombine.low %v982, %v989
  %v1005 = vcombine.low %v996, %v1003
  %v1007 = vunpack.c.l.s4 1966171168
  %v1008 = vunpack.c.0.s8 %v1007
  %v1009 = vlaneseq
  %v1010 = vshrl.u32 %v1009, 7
  %v1011 = vsub.s32 %v1008, %v1010
  %v1012 = vrot.slane %v1004, %v1011
  %v1014 = vunpack.c.l.s4 1966171168
  %v1015 = vunpack.c.0.s8 %v1014
  %v1016 = vlaneseq
  %v1017 = vshrl.u32 %v1016, 7
  %v1018 = vsub.s32 %v1015, %v1017
  %v1019 = vrot.slane %v1005, %v1018
  %v1020 = vcombine.low %v1012, %v1019
  %v1021 = vcombine.low %v943, %v951
  %v1022 = vcombine.low %v953, %v936
  %v1023 = vcombine.low %v950, %v952
  %v1025 = vunpack.c.l.s4 1966171168
  %v1026 = vunpack.c.0.s8 %v1025
  %v1027 = vlaneseq
  %v1028 = vshrl.u32 %v1027, 7
  %v1029 = vsub.s32 %v1026, %v1028
  %v1030 = vrot.slane %v1021, %v1029
  %v1032 = vunpack.c.l.s4 1966171168
  %v1033 = vunpack.c.0.s8 %v1032
  %v1034 = vlaneseq
  %v1035 = vshrl.u32 %v1034, 7
  %v1036 = vsub.s32 %v1033, %v1035
  %v1037 = vrot.slane %v1022, %v1036
  %v1039 = vunpack.c.l.s4 1966171168
  %v1040 = vunpack.c.0.s8 %v1039
  %v1041 = vlaneseq
  %v1042 = vshrl.u32 %v1041, 7
  %v1043 = vsub.s32 %v1040, %v1042
  %v1044 = vrot.slane %v1023, %v1043
  %v1045 = vcombine.low %v1030, %v1037
  %v1047 = vunpack.c.l.s4 1966171168
  %v1048 = vunpack.c.0.s8 %v1047
  %v1049 = vlaneseq
  %v1050 = vshrl.u32 %v1049, 7
  %v1051 = vsub.s32 %v1048, %v1050
  %v1052 = vrot.slane %v1045, %v1051
  %v1054 = vunpack.c.l.s4 1966171168
  %v1055 = vunpack.c.0.s8 %v1054
  %v1056 = vlaneseq
  %v1057 = vshrl.u32 %v1056, 7
  %v1058 = vsub.s32 %v1055, %v1057
  %v1059 = vrot.slane %v1044, %v1058
  %v1060 = vcombine.low %v1052, %v1059
  %v1061 = vcombine.low %v962, %v970
  %v1062 = vcombine.low %v969, %v971
  %v1064 = vunpack.c.l.s4 1983009808
  %v1065 = vunpack.c.0.s8 %v1064
  %v1066 = vlaneseq
  %v1067 = vshrl.u32 %v1066, 7
  %v1068 = vsub.s32 %v1065, %v1067
  %v1069 = vrot.slane %v1061, %v1068
  %v1071 = vunpack.c.l.s4 1983009808
  %v1072 = vunpack.c.0.s8 %v1071
  %v1073 = vlaneseq
  %v1074 = vshrl.u32 %v1073, 7
  %v1075 = vsub.s32 %v1072, %v1074
  %v1076 = vrot.slane %v1062, %v1075
  %v1077 = vcombine.low %v1069, %v1076
  %v1078 = vcombine.low %v969, %v962
  %v1080 = vunpack.c.l.s4 1983009808
  %v1081 = vunpack.c.0.s8 %v1080
  %v1082 = vlaneseq
  %v1083 = vshrl.u32 %v1082, 7
  %v1084 = vsub.s32 %v1081, %v1083
  %v1085 = vrot.slane %v1078, %v1084
  %v1086 = vcombine.low %v1069, %v1085
  %v1087 = vcombine.low %v970, %v969
  %v1088 = vcombine.low %v971, %v962
  %v1090 = vunpack.c.l.s4 1983009808
  %v1091 = vunpack.c.0.s8 %v1090
  %v1092 = vlaneseq
  %v1093 = vshrl.u32 %v1092, 7
  %v1094 = vsub.s32 %v1091, %v1093
  %v1095 = vrot.slane %v1087, %v1094
  %v1097 = vunpack.c.l.s4 1983009808
  %v1098 = vunpack.c.0.s8 %v1097
  %v1099 = vlaneseq
  %v1100 = vshrl.u32 %v1099, 7
  %v1101 = vsub.s32 %v1098, %v1100
  %v1102 = vrot.slane %v1088, %v1101
  %v1103 = vcombine.low %v1095, %v1102
  %v1109 = vsel %vm135, %v1020, 0
  %v1112 = vsel %vm135, %v1060, 0
  %vm1114 = vcmask 1043456
  %v1116 = vsel %vm1114, %v851, 0
  %1118 = vmatprep.subr.bf16.mxu0 0
  %1119 = vmatpush1.bf16.msra.mxu0 0
  %1120 = vmatprep.subr.bf16.mxu0 0
  %1121 = vmatpush1.bf16.msra.mxu0 0
  %1122 = vmatprep.subr.bf16.mxu0 0
  %1123 = vmatpush1.bf16.msra.mxu0 0
  %1124 = vmatprep.subr.bf16.mxu0 0
  %1125 = vmatpush1.bf16.msra.mxu0 0
  %1126 = vmatprep.subr.bf16.mxu0 0
  %1127 = vmatpush1.bf16.msra.mxu0 0
  %1128 = vmatprep.subr.bf16.mxu0 0
  %1129 = vmatpush1.bf16.msra.mxu0 0
  %1130 = vmatprep.subr.bf16.mxu0 0
  %1131 = vmatpush1.bf16.msra.mxu0 0
  %1132 = vmatprep.subr.bf16.mxu0 0
  %1133 = vmatpush1.bf16.msra.mxu0 %v1116
  %1134 = vmatprep.subr.bf16.mxu0 0
  %1135 = vmatpush2.bf16.msra.mxu0 0
  %1136 = vmatprep.subr.bf16.mxu0 0
  %1137 = vmatpush2.bf16.msra.mxu0 0
  %1138 = vmatprep.subr.bf16.mxu0 0
  %1139 = vmatpush2.bf16.msra.mxu0 0
  %1140 = vmatprep.subr.bf16.mxu0 0
  %1141 = vmatpush2.bf16.msra.mxu0 0
  %1142 = vmatprep.subr.bf16.mxu0 0
  %1143 = vmatpush2.bf16.msra.mxu0 0
  %1144 = vmatprep.subr.bf16.mxu0 0
  %1145 = vmatpush2.bf16.msra.mxu0 0
  %1146 = vmatprep.subr.bf16.mxu0 0
  %1147 = vmatpush2.bf16.msra.mxu0 0
  %1148 = vmatprep.subr.bf16.mxu0 0
  %1149 = vmatpush2.bf16.msra.mxu0 0
  %1150 = vmatprep.mubr.bf16.mxu0 0
  %1151 = vmatmul.mubr.bf16.gmra.mxu0 %v1109
  %v1152 = vpop.f32.mrf.mxu0
  %v1153 = vadd.f32 %v1077, %v1152
  %v1154 = vpop.f32.mrf.mxu0
  %v1155 = vpop.f32.mrf.mxu0
  %v1156 = vadd.f32 %v1086, %v1155
  %v1157 = vpop.f32.mrf.mxu0
  %1158 = vmatprep.mubr.bf16.mxu0 0
  %1159 = vmatmul.mubr.bf16.gmra.mxu0 %v1112
  %v1160 = vpop.f32.mrf.mxu0
  %v1161 = vadd.f32 %v1103, %v1160
  %v1162 = vpop.f32.mrf.mxu0
  %v1163 = vpop.f32.mrf.mxu0
  %v1164 = vadd.f32 %v1095, %v1163
  %v1165 = vpop.f32.mrf.mxu0
  %1166 = vdwg.mxu0
  %v1171 = vcombine.high %v1153, %v1153
  %v1173 = vunpack.c.l.s4 1983009808
  %v1174 = vunpack.c.0.s8 %v1173
  %v1175 = vlaneseq
  %v1176 = vshrl.u32 %v1175, 7
  %v1177 = vsub.s32 %v1174, %v1176
  %v1178 = vrot.slane %v1153, %v1177
  %v1180 = vunpack.c.l.s4 1983009808
  %v1181 = vunpack.c.0.s8 %v1180
  %v1182 = vlaneseq
  %v1183 = vshrl.u32 %v1182, 7
  %v1184 = vsub.s32 %v1181, %v1183
  %v1185 = vrot.slane %v1171, %v1184
  %v1186 = vcombine.high %v1178, %v1178
  %v1187 = vcombine.high %v1185, %v1185
  %v1188 = vcombine.high %v1156, %v1156
  %v1190 = vunpack.c.l.s4 1983009808
  %v1191 = vunpack.c.0.s8 %v1190
  %v1192 = vlaneseq
  %v1193 = vshrl.u32 %v1192, 7
  %v1194 = vsub.s32 %v1191, %v1193
  %v1195 = vrot.slane %v1156, %v1194
  %v1197 = vunpack.c.l.s4 1983009808
  %v1198 = vunpack.c.0.s8 %v1197
  %v1199 = vlaneseq
  %v1200 = vshrl.u32 %v1199, 7
  %v1201 = vsub.s32 %v1198, %v1200
  %v1202 = vrot.slane %v1188, %v1201
  %v1203 = vcombine.high %v1195, %v1195
  %v1204 = vcombine.high %v1202, %v1202
  %v1205 = vcombine.high %v1161, %v1161
  %v1207 = vunpack.c.l.s4 1983009808
  %v1208 = vunpack.c.0.s8 %v1207
  %v1209 = vlaneseq
  %v1210 = vshrl.u32 %v1209, 7
  %v1211 = vsub.s32 %v1208, %v1210
  %v1212 = vrot.slane %v1161, %v1211
  %v1214 = vunpack.c.l.s4 1983009808
  %v1215 = vunpack.c.0.s8 %v1214
  %v1216 = vlaneseq
  %v1217 = vshrl.u32 %v1216, 7
  %v1218 = vsub.s32 %v1215, %v1217
  %v1219 = vrot.slane %v1205, %v1218
  %v1220 = vcombine.high %v1212, %v1212
  %v1221 = vcombine.high %v1219, %v1219
  %v1223 = vunpack.c.l.s4 1983009808
  %v1224 = vunpack.c.0.s8 %v1223
  %v1225 = vlaneseq
  %v1226 = vshrl.u32 %v1225, 7
  %v1227 = vsub.s32 %v1224, %v1226
  %v1228 = vrot.slane %v1164, %v1227
  %v1229 = vcombine.high %v1228, %v1228
  %v1244 = vmax.f32 %v1178, 0.0
  %v1245 = vmax.f32 %v1186, 0.0
  %v1246 = vmax.f32 %v1185, 0.0
  %v1247 = vmax.f32 %v1187, 0.0
  %v1248 = vmax.f32 %v1195, 0.0
  %v1249 = vmax.f32 %v1203, 0.0
  %v1250 = vmax.f32 %v1202, 0.0
  %v1251 = vmax.f32 %v1204, 0.0
  %v1252 = vmax.f32 %v1212, 0.0
  %v1253 = vmax.f32 %v1220, 0.0
  %v1254 = vmax.f32 %v1219, 0.0
  %v1255 = vmax.f32 %v1221, 0.0
  %v1256 = vmax.f32 %v1228, 0.0
  %v1257 = vmax.f32 %v1229, 0.0
  %v1258 = vunpack.c.l.bf16 %v29
  %v1259 = vunpack.c.l.bf16 %v27
  %v1260 = vunpack.c.l.bf16 %v30
  %v1261 = vunpack.c.l.bf16 %v28
  %v1276 = vcombine.low %v1244, %v1244
  %v1277 = vcombine.low %v1245, %v1246
  %v1279 = vunpack.c.l.s4 1983009808
  %v1280 = vunpack.c.0.s8 %v1279
  %v1281 = vlaneseq
  %v1282 = vshrl.u32 %v1281, 7
  %v1283 = vsub.s32 %v1280, %v1282
  %v1284 = vrot.slane %v1276, %v1283
  %v1286 = vunpack.c.l.s4 1983009808
  %v1287 = vunpack.c.0.s8 %v1286
  %v1288 = vlaneseq
  %v1289 = vshrl.u32 %v1288, 7
  %v1290 = vsub.s32 %v1287, %v1289
  %v1291 = vrot.slane %v1277, %v1290
  %v1292 = vcombine.low %v1284, %v1291
  %v1293 = vcombine.low %v1247, %v1248
  %v1294 = vcombine.low %v1249, %v1250
  %v1296 = vunpack.c.l.s4 1983009808
  %v1297 = vunpack.c.0.s8 %v1296
  %v1298 = vlaneseq
  %v1299 = vshrl.u32 %v1298, 7
  %v1300 = vsub.s32 %v1297, %v1299
  %v1301 = vrot.slane %v1293, %v1300
  %v1303 = vunpack.c.l.s4 1983009808
  %v1304 = vunpack.c.0.s8 %v1303
  %v1305 = vlaneseq
  %v1306 = vshrl.u32 %v1305, 7
  %v1307 = vsub.s32 %v1304, %v1306
  %v1308 = vrot.slane %v1294, %v1307
  %v1309 = vcombine.low %v1301, %v1308
  %v1310 = vcombine.low %v1251, %v1251
  %v1311 = vcombine.low %v1252, %v1253
  %v1313 = vunpack.c.l.s4 1983009808
  %v1314 = vunpack.c.0.s8 %v1313
  %v1315 = vlaneseq
  %v1316 = vshrl.u32 %v1315, 7
  %v1317 = vsub.s32 %v1314, %v1316
  %v1318 = vrot.slane %v1310, %v1317
  %v1320 = vunpack.c.l.s4 1983009808
  %v1321 = vunpack.c.0.s8 %v1320
  %v1322 = vlaneseq
  %v1323 = vshrl.u32 %v1322, 7
  %v1324 = vsub.s32 %v1321, %v1323
  %v1325 = vrot.slane %v1311, %v1324
  %v1326 = vcombine.low %v1318, %v1325
  %v1327 = vcombine.low %v1254, %v1255
  %v1328 = vcombine.low %v1256, %v1257
  %v1330 = vunpack.c.l.s4 1983009808
  %v1331 = vunpack.c.0.s8 %v1330
  %v1332 = vlaneseq
  %v1333 = vshrl.u32 %v1332, 7
  %v1334 = vsub.s32 %v1331, %v1333
  %v1335 = vrot.slane %v1327, %v1334
  %v1337 = vunpack.c.l.s4 1983009808
  %v1338 = vunpack.c.0.s8 %v1337
  %v1339 = vlaneseq
  %v1340 = vshrl.u32 %v1339, 7
  %v1341 = vsub.s32 %v1338, %v1340
  %v1342 = vrot.slane %v1328, %v1341
  %v1343 = vcombine.low %v1335, %v1342
  %v1348 = vadd.f32 %v1258, %v1292
  %v1349 = vadd.f32 %v1259, %v1309
  %v1350 = vadd.f32 %v1260, %v1326
  %v1351 = vadd.f32 %v1261, %v1343
  %v1352 = vpack.c.bf16 %v1349, %v1348
  %v1353 = vpack.c.bf16 %v1351, %v1350
  %v1356 = vunpack.c.l.b16 %v1352
  %v1357 = vunpack.c.h.b16 %v1352
  %v1358 = vunpack.c.l.b16 %v1353
  %v1359 = vunpack.c.h.b16 %v1353
  %v1360 = vpack.c.b16 %v1356, %v1356
  %v1361 = vpack.c.b16 %v1357, %v1357
  %v1362 = vpack.c.b16 %v1358, %v1358
  %v1363 = vpack.c.b16 %v1359, %v1359
  %vm1364 = vcmask 1042432
  %vm1365 = vcmask 1046532
  %vm1366 = vmor %vm1364, %vm1365
  %v1367 = vrot.slane %v1360, 5
  %v1368 = vrot.slane %v1367, 4
  %v1369 = vrot.slane %v1361, 5
  %v1370 = vsel %vm1366, %v1368, %v1369
  %v1371 = vrot.slane %v1369, 4
  %v1372 = vrot.slane %v1362, 5
  %v1373 = vrot.slane %v1372, 4
  %v1374 = vrot.slane %v1363, 5
  %v1375 = vsel %vm1366, %v1373, %v1374
  %v1376 = vrot.slane %v1374, 4
  %vm1381 = vcmask 60416
  %1382 = vst.msk [vmem:[%s5] sm:$0xf] %vm1381, %v1370
  %vm1383 = vcmask 59392
  %1384 = vst.msk [vmem:[%s5 + $0x4] sm:$0x7] %vm1383, %v1371
  %1385 = vst.msk [vmem:[%s5 + $0x8] sm:$0xf] %vm1381, %v1375
  %1386 = vst.msk [vmem:[%s5 + $0xc] sm:$0x7] %vm1383, %v1376
  %v1401 = vcombine.low %v738, %v740
  %v1402 = vcombine.low %v742, %v744
  %v1404 = vunpack.c.l.s4 1983009808
  %v1405 = vunpack.c.0.s8 %v1404
  %v1406 = vlaneseq
  %v1407 = vshrl.u32 %v1406, 7
  %v1408 = vsub.s32 %v1405, %v1407
  %v1409 = vrot.slane %v1401, %v1408
  %v1411 = vunpack.c.l.s4 1983009808
  %v1412 = vunpack.c.0.s8 %v1411
  %v1413 = vlaneseq
  %v1414 = vshrl.u32 %v1413, 7
  %v1415 = vsub.s32 %v1412, %v1414
  %v1416 = vrot.slane %v1402, %v1415
  %v1417 = vcombine.low %v1409, %v1416
  %v1418 = vcombine.low %v746, %v748
  %v1420 = vunpack.c.l.s4 1983009808
  %v1421 = vunpack.c.0.s8 %v1420
  %v1422 = vlaneseq
  %v1423 = vshrl.u32 %v1422, 7
  %v1424 = vsub.s32 %v1421, %v1423
  %v1425 = vrot.slane %v1418, %v1424
  %v1427 = vunpack.c.l.s4 1983009808
  %v1428 = vunpack.c.0.s8 %v1427
  %v1429 = vlaneseq
  %v1430 = vshrl.u32 %v1429, 7
  %v1431 = vsub.s32 %v1428, %v1430
  %v1432 = vrot.slane %v750, %v1431
  %v1433 = vcombine.low %v1425, %v1432
  %v1434 = vcombine.low %v752, %v754
  %v1435 = vcombine.low %v756, %v758
  %v1437 = vunpack.c.l.s4 1983009808
  %v1438 = vunpack.c.0.s8 %v1437
  %v1439 = vlaneseq
  %v1440 = vshrl.u32 %v1439, 7
  %v1441 = vsub.s32 %v1438, %v1440
  %v1442 = vrot.slane %v1434, %v1441
  %v1444 = vunpack.c.l.s4 1983009808
  %v1445 = vunpack.c.0.s8 %v1444
  %v1446 = vlaneseq
  %v1447 = vshrl.u32 %v1446, 7
  %v1448 = vsub.s32 %v1445, %v1447
  %v1449 = vrot.slane %v1435, %v1448
  %v1450 = vcombine.low %v1442, %v1449
  %v1451 = vcombine.low %v760, %v762
  %v1453 = vunpack.c.l.s4 1983009808
  %v1454 = vunpack.c.0.s8 %v1453
  %v1455 = vlaneseq
  %v1456 = vshrl.u32 %v1455, 7
  %v1457 = vsub.s32 %v1454, %v1456
  %v1458 = vrot.slane %v1451, %v1457
  %v1460 = vunpack.c.l.s4 1983009808
  %v1461 = vunpack.c.0.s8 %v1460
  %v1462 = vlaneseq
  %v1463 = vshrl.u32 %v1462, 7
  %v1464 = vsub.s32 %v1461, %v1463
  %v1465 = vrot.slane %v764, %v1464
  %v1466 = vcombine.low %v1458, %v1465
  %v1471 = vpack.c.bf16 %v1433, %v1417
  %v1472 = vpack.c.bf16 %v1466, %v1450
  %v1475 = vunpack.c.l.b16 %v1471
  %v1476 = vunpack.c.h.b16 %v1471
  %v1477 = vunpack.c.l.b16 %v1472
  %v1478 = vunpack.c.h.b16 %v1472
  %v1479 = vpack.c.b16 %v1475, %v1475
  %v1480 = vpack.c.b16 %v1476, %v1476
  %v1481 = vpack.c.b16 %v1477, %v1477
  %v1482 = vpack.c.b16 %v1478, %v1478
  %1483 = vrot.lane.b32.xlu0 %v1479, 120
  %v1484 = vpop.permute.xlu0 %1483
  %1485 = vrot.lane.b32.xlu0 %v1480, 120
  %v1486 = vpop.permute.xlu0 %1485
  %1487 = vrot.lane.b32.xlu0 %v1481, 120
  %v1488 = vpop.permute.xlu0 %1487
  %1489 = vrot.lane.b32.xlu0 %v1482, 120
  %v1490 = vpop.permute.xlu0 %1489
  %1495 = vst.msk [vmem:[%s6] sm:$0xf] %vm1381, %v1484
  %1496 = vst.msk [vmem:[%s6 + $0x4] sm:$0x7] %vm1383, %v1486
  %1497 = vst.msk [vmem:[%s6 + $0x8] sm:$0xf] %vm1381, %v1488
  %1498 = vst.msk [vmem:[%s6 + $0xc] sm:$0x7] %vm1383, %v1490
  // Predicated region
  $region22: #{tpu_custom_call.1} parent=0 // pred_check
    _
  $region23: #{tpu_custom_call.1} parent=0 // pred_check_branch
    %1500 = sbr.rel (0) target = $region25
  $region24: #{tpu_custom_call.1} parent=0 // pred_region
    _
  $region25: #{tpu_custom_call.1} parent=0 // pred_fallthru
    _
  // Predicated region
  $region26: #{tpu_custom_call.1} parent=0 // pred_check
    _
  $region27: #{tpu_custom_call.1} parent=0 // pred_check_branch
    %1502 = sbr.rel (0) target = $region29
  $region28: #{tpu_custom_call.1} parent=0 // pred_region
    _
  $region29: #{tpu_custom_call.1} parent=0 // pred_fallthru
    _
  // Predicated region
  $region30: #{tpu_custom_call.1} parent=0 // pred_check
    _
  $region31: #{tpu_custom_call.1} parent=0 // pred_check_branch
    %1504 = sbr.rel (0) target = $region33
  $region32: #{tpu_custom_call.1} parent=0 // pred_region
    _
  $region33: #{tpu_custom_call.1} parent=0 // pred_fallthru
    _
  // Predicated region
  $region34: #{tpu_custom_call.1} parent=0 // pred_check
    _
  $region35: #{tpu_custom_call.1} parent=0 // pred_check_branch
    %1506 = sbr.rel (0) target = $region37
  $region36: #{tpu_custom_call.1} parent=0 // pred_region
    _
  $region37: #{tpu_custom_call.1} parent=0 // pred_fallthru
    _

</llo_original>
